<compile_context>
chip_gen: v5e
topology: v5e:2x2
jax: 0.10.0
libtpu: 0.0.40
codegen_flags: <defaults>
</compile_context>

<pallas_src>
import functools

import jax
import jax.numpy as jnp
from jax import lax
from jax.experimental import pallas as pl
from jax.experimental.pallas import tpu as pltpu

EPS = 1e-5


def _ce_reg_stable_kernel(x_ref, prior_ref, psum_ref, out_ref, *,
                          eps, block_rows, total_rows, need_mask, use_mxu):
    """One batch tile -> one f32 partial sum of prior-weighted log(softmax+eps)."""
    x = x_ref[...].astype(jnp.float32)                  # (tb, C) cast after load
    prior_sum = psum_ref[0]                             # f32 scalar from SMEM

    # Numerically stable softmax pieces along the class (lane) axis.
    m = jnp.max(x, axis=-1, keepdims=True)              # (tb, 1)   XLU
    e = jnp.exp(x - m)                                  # (tb, C)   EUP
    denom = jnp.sum(e, axis=-1, keepdims=True)          # (tb, 1)   XLU
    # log(softmax + eps) = log(e + eps*denom) - log(denom)
    t = jnp.log(e + eps * denom)                        # (tb, C)   EUP + VPU fma
    log_denom = jnp.log(denom)                          # (tb, 1)

    if use_mxu:
        # Prior-weighted lane reduction on the (otherwise idle) MXU:
        # (tb, C) @ (C, 1) -> (tb, 1).  Used on the bf16 input path where
        # VPU/EUP are the second-binding units at full HBM rate.
        weighted = jnp.dot(t, prior_ref[...], preferred_element_type=jnp.float32)
    else:
        # Exact f32 VPU/XLU reduce (f32 inputs are HBM-bound; MXU gains nothing).
        weighted = jnp.sum(prior_ref[...] * t, axis=-1, keepdims=True)

    per_row = weighted - log_denom * prior_sum           # (tb, 1)

    if need_mask:  # static: only emitted when B % tb != 0
        row = (pl.program_id(0) * block_rows
               + lax.broadcasted_iota(jnp.int32, per_row.shape, 0))
        per_row = jnp.where(row < total_rows, per_row, 0.0)

    partial = jnp.sum(per_row, axis=0, keepdims=True)    # (1, 1) tile partial
    # Lane-dense (8, 128) output tile -> one unmasked vector store per step.
    out_ref[...] = jnp.broadcast_to(partial, out_ref.shape)


def _tpu_generation_defaults():
    """Generation-aware per-step input-byte target, VMEM limit and min grid steps."""
    kind = ""
    try:
        kind = jax.devices()[0].device_kind.lower()
    except Exception:
        pass
    if "v7" in kind:
        # 64 MiB physical VMEM: ~4 MiB input tiles, cap the whole budget at 44 MiB,
        # and require >= 2 grid steps so both TensorCores are used.
        return dict(tile_target=4 << 20, vmem_limit=44 << 20, min_steps=2)
    if "v6" in kind:
        # 128 MiB physical: big limit so 4-8 MiB input tiles still double-buffer.
        return dict(tile_target=6 << 20, vmem_limit=96 << 20, min_steps=1)
    if "v5" in kind:
        # Lower HBM BW -> ~2 MiB tiles already amortize the per-step cost.
        return dict(tile_target=2 << 20, vmem_limit=64 << 20, min_steps=1)
    return dict(tile_target=2 << 20, vmem_limit=32 << 20, min_steps=1)


def _select_block_rows(B, C, in_itemsize, *, tile_target, vmem_limit, min_steps, align):
    # Explicit VMEM budget per batch row: double-buffered native input tile plus
    # ~3 live f32 (tb, C) temporaries (x cast, e, t).
    per_row_bytes = C * (2 * in_itemsize + 3 * 4)
    budget = int(vmem_limit * 0.65)              # headroom: prior/out/compiler scratch
    tb = min(budget // max(per_row_bytes, 1),
             tile_target // max(C * in_itemsize, 1))
    if min_steps > 1 and B >= min_steps * align:
        tb = min(tb, -(-B // min_steps))         # guarantee >= min_steps grid steps
    return max(align, tb)


def cross_entropy_loss_reg_stable(outputs, noisy_prior, *, eps=EPS, block_rows=None):
    """outputs: (B, C) float array; noisy_prior: (C,) array -> scalar f32 loss."""
    assert outputs.ndim == 2, "outputs must be (batch, num_class)"
    B, C = outputs.shape
    in_itemsize = jnp.dtype(outputs.dtype).itemsize
    cfg = _tpu_generation_defaults()

    # TODO(synk): for tiny class counts (C << 128) repack batch rows onto the
    # 128-lane axis to recover lane utilization; current layout keeps C on lanes.
    align = max(8, 32 // max(in_itemsize, 1))    # sublane packing unit per dtype
    if block_rows is None:
        tb = _select_block_rows(B, C, in_itemsize, align=align, **cfg)
    else:
        tb = int(block_rows)
    if tb >= B:
        tb = B                                   # single full-extent block
    else:
        tb = max(align, (tb // align) * align)   # multiple of the sublane pack

    grid_len = pl.cdiv(B, tb)
    need_mask = (B % tb) != 0
    use_mxu = (jnp.dtype(outputs.dtype) != jnp.float32) and (C >= 128)

    # Hoisted prior preprocessing: f32 cast and sum(prior) happen once in the wrapper.
    prior_f32 = noisy_prior.astype(jnp.float32)
    prior_sum_arr = jnp.sum(prior_f32).reshape(1)            # (1,) f32 -> SMEM scalar
    if use_mxu:
        prior_arg = prior_f32.reshape(C, 1)                  # MXU matvec column
        prior_spec = pl.BlockSpec((C, 1), lambda i: (0, 0))  # resident across steps
    else:
        prior_arg = prior_f32.reshape(1, C)                  # VPU broadcast row
        prior_spec = pl.BlockSpec((1, C), lambda i: (0, 0))

    kernel = functools.partial(
        _ce_reg_stable_kernel, eps=eps, block_rows=tb, total_rows=B,
        need_mask=need_mask, use_mxu=use_mxu)

    res = pl.pallas_call(
        kernel,
        out_shape=jax.ShapeDtypeStruct((grid_len, 8, 128), jnp.float32),
        grid=(grid_len,),
        in_specs=[
            pl.BlockSpec((tb, C), lambda i: (i, 0)),                   # batch tile
            prior_spec,                                                # resident prior
            pl.BlockSpec(memory_space=pltpu.MemorySpace.SMEM),         # sum(prior) scalar
        ],
        out_specs=pl.BlockSpec((None, 8, 128), lambda i: (i, 0, 0)),   # per-step partial
        compiler_params=pltpu.CompilerParams(
            dimension_semantics=("parallel",),        # independent batch tiles (megacore)
            vmem_limit_bytes=cfg["vmem_limit"],
        ),
    )(outputs, prior_arg, prior_sum_arr)

    partials = res[:, 0, 0]                           # (grid_len,) per-step partial sums
    return -(jnp.sum(partials) / jnp.float32(B))


def _reference(outputs, noisy_prior, eps=EPS):
    out_f32 = outputs.astype(jnp.float32)
    prior_f32 = noisy_prior.astype(jnp.float32)
    log_out = jnp.log(jax.nn.softmax(out_f32, axis=-1) + eps)
    return -jnp.mean(jnp.sum(prior_f32[None, :] * log_out, axis=1))


if __name__ == "__main__":
    key = jax.random.PRNGKey(0)
    k_out, k_prior, k_out2, k_prior2 = jax.random.split(key, 4)

    # --- small demo shape consistent with the module (batch x num_class) ---
    B, C = 8, 16
    outputs = jax.random.normal(k_out, (B, C), dtype=jnp.float32)
    noisy_prior = jax.nn.softmax(jax.random.normal(k_prior, (C,), dtype=jnp.float32))

    loss = jax.block_until_ready(cross_entropy_loss_reg_stable(outputs, noisy_prior))
    ref = _reference(outputs, noisy_prior)
    assert jnp.allclose(loss, ref, rtol=1e-5, atol=1e-5), (loss, ref)

    # --- bf16 pass-through (native-dtype HBM traffic, f32 math in-kernel) ---
    loss_bf16 = jax.block_until_ready(
        cross_entropy_loss_reg_stable(outputs.astype(jnp.bfloat16), noisy_prior))
    assert jnp.allclose(loss_bf16, ref, rtol=2e-2, atol=2e-2), (loss_bf16, ref)

    # --- tiled path: several grid steps + ragged last block (in-kernel mask) ---
    B2, C2 = 100, 128
    outputs2 = jax.random.normal(k_out2, (B2, C2), dtype=jnp.float32)
    prior2 = jax.nn.softmax(jax.random.normal(k_prior2, (C2,), dtype=jnp.float32))
    loss2 = jax.block_until_ready(
        cross_entropy_loss_reg_stable(outputs2, prior2, block_rows=32))  # grid=(4,)
    ref2 = _reference(outputs2, prior2)
    assert jnp.allclose(loss2, ref2, rtol=1e-5, atol=1e-5), (loss2, ref2)

    # --- bf16 with C>=128: exercises the MXU prior-weighted reduction path ---
    loss3 = jax.block_until_ready(
        cross_entropy_loss_reg_stable(outputs2.astype(jnp.bfloat16), prior2,
                                      block_rows=32))
    assert jnp.allclose(loss3, ref2, rtol=2e-2, atol=2e-2), (loss3, ref2)

    print("KERNEL_OK")
</pallas_src>

<mosaic_0001>
module attributes {stable_mosaic.version = 11 : i64} {
  func.func @_ce_reg_stable_kernel(%arg0: i32, %arg1: memref<8x16xf32, #tpu.memory_space<vmem>>, %arg2: memref<1x16xf32, #tpu.memory_space<vmem>>, %arg3: memref<1xf32, #tpu.memory_space<smem>>, %arg4: memref<1x8x128xf32, #tpu.memory_space<vmem>>) attributes {dimension_semantics = [#tpu.dimension_semantics<parallel>], iteration_bounds = array<i64: 1>, scalar_prefetch = 0 : i64, scratch_operands = 0 : i64, tpu.core_type = #tpu.core_type<tc>, window_params = [{transform_indices = @transform_0, window_bounds = array<i64: 8, 16>}, {pipeline_mode = #tpu.pipeline_mode<synchronous>, transform_indices = @transform_1, window_bounds = array<i64: 1, 16>}, {transform_indices = @transform_2, window_bounds = array<i64: 1>}, {transform_indices = @transform_3, window_bounds = array<i64: 1, 8, 128>}]} {
    %c0 = arith.constant 0 : index
    %c0_0 = arith.constant 0 : index
    %0 = vector.load %arg1[%c0, %c0_0] : memref<8x16xf32, #tpu.memory_space<vmem>>, vector<8x16xf32>
    %c0_1 = arith.constant 0 : index
    %1 = memref.load %arg3[%c0_1] : memref<1xf32, #tpu.memory_space<smem>>
    %cst = arith.constant dense<0xFF800000> : vector<8xf32>
    %2 = vector.multi_reduction <maximumf>, %0, %cst [1] : vector<8x16xf32> to vector<8xf32>
    %3 = vector.shape_cast %2 : vector<8xf32> to vector<8x1xf32>
    %4 = vector.broadcast %3 : vector<8x1xf32> to vector<8x16xf32>
    %5 = arith.subf %0, %4 : vector<8x16xf32>
    %6 = math.exp %5 : vector<8x16xf32>
    %cst_2 = arith.constant dense<0.000000e+00> : vector<8xf32>
    %7 = vector.multi_reduction <add>, %6, %cst_2 [1] : vector<8x16xf32> to vector<8xf32>
    %8 = vector.shape_cast %7 : vector<8xf32> to vector<8x1xf32>
    %cst_3 = arith.constant 9.99999974E-6 : f32
    %9 = vector.broadcast %cst_3 : f32 to vector<8x1xf32>
    %10 = arith.mulf %9, %8 : vector<8x1xf32>
    %11 = vector.broadcast %10 : vector<8x1xf32> to vector<8x16xf32>
    %12 = arith.addf %6, %11 : vector<8x16xf32>
    %13 = math.log %12 : vector<8x16xf32>
    %14 = math.log %8 : vector<8x1xf32>
    %c0_4 = arith.constant 0 : index
    %c0_5 = arith.constant 0 : index
    %15 = vector.load %arg2[%c0_4, %c0_5] : memref<1x16xf32, #tpu.memory_space<vmem>>, vector<1x16xf32>
    %16 = vector.broadcast %15 : vector<1x16xf32> to vector<8x16xf32>
    %17 = arith.mulf %16, %13 : vector<8x16xf32>
    %cst_6 = arith.constant dense<0.000000e+00> : vector<8xf32>
    %18 = vector.multi_reduction <add>, %17, %cst_6 [1] : vector<8x16xf32> to vector<8xf32>
    %19 = vector.shape_cast %18 : vector<8xf32> to vector<8x1xf32>
    %20 = vector.broadcast %1 : f32 to vector<8x1xf32>
    %21 = arith.mulf %14, %20 : vector<8x1xf32>
    %22 = arith.subf %19, %21 : vector<8x1xf32>
    %cst_7 = arith.constant dense<0.000000e+00> : vector<1xf32>
    %23 = vector.multi_reduction <add>, %22, %cst_7 [0] : vector<8x1xf32> to vector<1xf32>
    %24 = vector.shape_cast %23 : vector<1xf32> to vector<1x1xf32>
    %25 = vector.shape_cast %24 : vector<1x1xf32> to vector<1x1xf32>
    %26 = vector.broadcast %25 : vector<1x1xf32> to vector<8x128xf32>
    %c0_8 = arith.constant 0 : index
    %c0_9 = arith.constant 0 : index
    %c0_10 = arith.constant 0 : index
    %27 = vector.load %arg4[%c0_8, %c0_9, %c0_10] : memref<1x8x128xf32, #tpu.memory_space<vmem>>, vector<1x8x128xf32>
    %28 = vector.shape_cast %27 : vector<1x8x128xf32> to vector<8x128xf32>
    %29 = vector.shape_cast %26 : vector<8x128xf32> to vector<1x8x128xf32>
    tpu.vector_store %arg4[%c0_8, %c0_9, %c0_10], %29 {strides = array<i32>} : memref<1x8x128xf32, #tpu.memory_space<vmem>>, vector<1x8x128xf32>,
    return
  }
  func.func @transform_0(%arg0: i32) -> (i32, i32) {
    %c0_i32 = arith.constant 0 : i32
    %c0_i32_0 = arith.constant 0 : i32
    return %arg0, %c0_i32 : i32, i32
  }
  func.func @transform_1(%arg0: i32) -> (i32, i32) {
    %c0_i32 = arith.constant 0 : i32
    %c0_i32_0 = arith.constant 0 : i32
    %c0_i32_1 = arith.constant 0 : i32
    return %c0_i32, %c0_i32_0 : i32, i32
  }
  func.func @transform_2(%arg0: i32) -> i32 {
    %c0_i32 = arith.constant 0 : i32
    %c0_i32_0 = arith.constant 0 : i32
    return %c0_i32 : i32
  }
  func.func @transform_3(%arg0: i32) -> (i32, i32, i32) {
    %c0_i32 = arith.constant 0 : i32
    %c0_i32_0 = arith.constant 0 : i32
    %c0_i32_1 = arith.constant 0 : i32
    return %arg0, %c0_i32, %c0_i32_0 : i32, i32, i32
  }
}

</mosaic_0001>

<llo_original>
// kernel: tpu_custom_call.1
$region0: #{tpu_custom_call.1}
  #allocation0 [shape = 'u32[]', space=smem, size = 0x4, offset = 0x4, fixed_abs, tag = 'smem constant byte address 0x4 - core index']
  #allocation1 [shape = 'u32[72,128]{1,0:T(1,128)}', space=vmem, size = 0x9000, scoped, tag = 'internal scratch']
  #allocation2 [shape = 'f32[1]{0:T(128)S(6)}', space=smem, size = 0x200, scoped, tag = 'scoped memory for tpu_custom_call.1']
  %s0 = inlined_call_operand.hbm [shape: f32[8,16], index: 0, kind: input, shape index: {}]
  %s1 = inlined_call_operand.vmem [shape: f32[1,16], index: 1, kind: input, shape index: {}]
  %s2 = inlined_call_operand.<no memory space> [shape: f32[1], index: 2, kind: input, shape index: {}]
  %s3 = inlined_call_operand.hbm [shape: f32[1,8,128], index: 3, kind: output, shape index: {}]
  %s4 = sld [smem:[#allocation0]]
  $region26: #{tpu_custom_call.1} parent=0
    _
  %s6 = ssub.s32 1, %s4
  %s7 = scalar_select 0, %s6, %s4
  %8 = sst [smem:[#allocation2]] %s2
  $region1: #{tpu_custom_call.1} parent=0
    #allocation3 [shape = 'u8[4096]{0}', space=vmem, size = 0x1000, scoped, tag = 'input window, operand 0, single buffered']
    #allocation4 [shape = 's32[1]{0}', space=sflag, size = 0x4, scoped, tag = 'scoped memory for tpu_custom_call.1']
    #allocation5 [shape = 's32[1]{0}', space=sflag, size = 0x4, scoped, tag = 'scoped memory for tpu_custom_call.1']
    #allocation6 [shape = 'u8[4096]{0}', space=vmem, size = 0x1000, scoped, tag = 'output window, operand 0, single buffered']
    %9 = vsyncpa [#allocation4], 0
    %10 = vsyncpa [#allocation5], 0
    // Predicated region
    $region2: #{tpu_custom_call.1} parent=1 // pred_check
      _
    $region3: #{tpu_custom_call.1} parent=1 // pred_check_branch
      %12 = sbr.rel (0) target = $region5
    $region4: #{tpu_custom_call.1} parent=1 // pred_region
      %14 = vsyncadd [#allocation4], 0
      %s16 = sshll.u32 %s0, 4
      %s17 = int_to_ptr.hbm [resolvable:$true] %s16
      %s18 = sshll.u32 [#allocation3], 4
      %s19 = int_to_ptr.vmem [resolvable:$true] %s18
      %21 = dma.hbm_to_vmem [thread:$0]  %s17, 128, %s19, [#allocation4]
    $region5: #{tpu_custom_call.1} parent=1 // pred_fallthru
      _
    // Predicated region
    $region6: #{tpu_custom_call.1} parent=1 // pred_check
      _
    $region7: #{tpu_custom_call.1} parent=1 // pred_check_branch
      %23 = sbr.rel (0) target = $region9
    $region8: #{tpu_custom_call.1} parent=1 // pred_region
      _
    $region9: #{tpu_custom_call.1} parent=1 // pred_fallthru
      _
    // Predicated region
    $region10: #{tpu_custom_call.1} parent=1 // pred_check
      _
    $region11: #{tpu_custom_call.1} parent=1 // pred_check_branch
      %25 = sbr.rel (0) target = $region13
    $region12: #{tpu_custom_call.1} parent=1 // pred_region
      _
    $region13: #{tpu_custom_call.1} parent=1 // pred_fallthru
      _
    // Predicated region
    $region14: #{tpu_custom_call.1} parent=1 // pred_check
      _
    $region15: #{tpu_custom_call.1} parent=1 // pred_check_branch
      %27 = sbr.rel (0) target = $region17
    $region16: #{tpu_custom_call.1} parent=1 // pred_region
      %29 = dma.done [#allocation4], 128
    $region17: #{tpu_custom_call.1} parent=1 // pred_fallthru
      _
    %v30 = vld [vmem:[#allocation3] sm:$0xff]
    %s31 = sld [smem:[#allocation2]]
    %vm32 = vcmask 130048
    %v33 = vsel %vm32, %v30, -inf
    %34 = vmax.xlane.f32.xlu0 %v33
    %v35 = vpop.xlane.xlu0 %34
    %v36 = vsub.f32 %v30, %v35
    %v37 = vmul.f32 %v36, 1.442695
    %v38 = vpow.pop %v37
    %v39 = vsel %vm32, %v38, 0.0
    %40 = vadd.xlane.f32.xlu0 %v39
    %v41 = vpop.xlane.xlu0 %40
    %v42 = vmul.f32 %v41, 1e-05
    %v43 = vadd.f32 %v38, %v42
    %v44 = vlog2.pop %v43
    %v45 = vmul.f32 %v44, 0.6931472
    %v46 = vlog2.pop %v41
    %v47 = vmul.f32 %v46, 0.6931472
    %v48 = vld [vmem:[%s1] sm:$0x1]
    %v50 = vperm.slane %v48, 0
    %v52 = vmul.f32 %v50, %v45
    %v53 = vsel %vm32, %v52, 0.0
    %54 = vadd.xlane.f32.xlu0 %v53
    %v55 = vpop.xlane.xlu0 %54
    %v56 = vstv %s31
    %v57 = vmul.f32 %v47, %v56
    %v58 = vsub.f32 %v55, %v57
    %v59 = vrot.slane %v58, 4
    %v60 = vadd.f32 %v58, %v59
    %v61 = vrot.slane %v60, 2
    %v62 = vadd.f32 %v60, %v61
    %v63 = vrot.slane %v62, 1
    %v64 = vadd.f32 %v62, %v63
    %65 = vst [vmem:[#allocation6] sm:$0xff] %v64
    // Predicated region
    $region18: #{tpu_custom_call.1} parent=1 // pred_check
      _
    $region19: #{tpu_custom_call.1} parent=1 // pred_check_branch
      %67 = sbr.rel (0) target = $region21
    $region20: #{tpu_custom_call.1} parent=1 // pred_region
      %69 = vsyncadd [#allocation5], 0
      %s71 = sshll.u32 [#allocation6], 4
      %s72 = int_to_ptr.vmem [resolvable:$true] %s71
      %s73 = sshll.u32 %s3, 4
      %s74 = int_to_ptr.hbm [resolvable:$true] %s73
      %76 = dma.vmem_to_hbm [thread:$0]  %s72, 128, %s74, [#allocation5]
    $region21: #{tpu_custom_call.1} parent=1 // pred_fallthru
      _
    // Predicated region
    $region22: #{tpu_custom_call.1} parent=1 // pred_check
      _
    $region23: #{tpu_custom_call.1} parent=1 // pred_check_branch
      %78 = sbr.rel (0) target = $region25
    $region24: #{tpu_custom_call.1} parent=1 // pred_region
      %80 = dma.done [#allocation5], 128
    $region25: #{tpu_custom_call.1} parent=1 // pred_fallthru
      _
    %81 = vsyncpa [#allocation4], 1
    %82 = vsyncpa [#allocation5], 1

</llo_original>
